<compile_context>
chip_gen: v7x
topology: tpu7x:2x2x1
jax: 0.10.0
libtpu: 0.0.40
codegen_flags: <defaults>
</compile_context>

<pallas_src>
import functools

import jax
import jax.numpy as jnp
from jax.experimental import pallas as pl
from jax.experimental.pallas import tpu as pltpu

LANE = 128
SUBLANE = 8


def _round_up(n: int, m: int) -> int:
    return -(-n // m) * m


def _pick_row_tile(n: int, target: int = 256):
    """Row tile TM (multiple of 8; target=256 matches the v6e/v7x 256x256 MXU
    and is a multiple of 128 for v5e) and padded node count Np (multiple of TM).
    Small graphs still get >= 2 row blocks so the A-tile DMA pipelines."""
    if n >= 2 * target:
        tm = target
    else:
        tm = max(SUBLANE, _round_up(-(-n // 2), SUBLANE))
    return tm, _round_up(n, tm)


def _vmem_limit_bytes(*byte_counts) -> int:
    est = int(sum(int(b) for b in byte_counts)) + (4 << 20)
    # Explicit scoped-VMEM request; capped at 48 MiB so it also fits v7x (64 MiB
    # physical). The floor matches v5e's 16 MiB default scoped limit.
    return int(min(max(est, 16 << 20), 48 << 20))


# ----------------------------------------------------------------------------
# Kernels
# ----------------------------------------------------------------------------
def _transform_kernel(x_ref, w_ref, o_ref):
    """HW_0 = X @ W_0 : bf16 inputs, f32 MXU accumulation, bf16 output."""
    o_ref[...] = jnp.dot(
        x_ref[...], w_ref[...], preferred_element_type=jnp.float32
    ).astype(o_ref.dtype)


def _aggregate_kernel(a_ref, hw_ref, b_ref, *rest, is_last):
    """One GCN layer on one row tile of nodes.

    a_ref  : [TM, Np]  streamed bf16 row tile of A_hat
    hw_ref : [Np, Fp]  resident bf16 transformed features (H @ W) of this layer
    b_ref  : [1,  Fp]  resident f32 bias (last layer's padded lanes = -1e30)
    rest   : (w_next_ref, o_ref) for hidden layers, (o_ref,) for the last one.
    """
    o_ref = rest[-1]
    # Aggregation: the dominant 2*N^2*F term -> bf16 MXU, f32 accumulation.
    agg = jnp.dot(a_ref[...], hw_ref[...], preferred_element_type=jnp.float32)
    agg = agg + b_ref[...]  # f32 bias add
    if not is_last:
        w_next_ref = rest[0]
        h = jnp.maximum(agg, 0.0)  # ReLU in f32
        # Dropout(p=0.5) is the identity in eval mode.
        # TODO(synk): training-mode dropout would need an in-kernel RNG mask.
        # Fuse the NEXT layer's feature transform (row-independent), so the
        # hidden activation never needs a second pass; store bf16 for the
        # next aggregation's MXU inputs.
        o_ref[...] = jnp.dot(
            h.astype(hw_ref.dtype), w_next_ref[...],
            preferred_element_type=jnp.float32,
        ).astype(o_ref.dtype)
    else:
        # log_softmax over the lane (class) axis, in f32. Padded class lanes
        # carry ~-1e30 from the bias and drop out of the sum exactly.
        m = jnp.max(agg, axis=1, keepdims=True)
        z = agg - m
        lse = jnp.log(jnp.sum(jnp.exp(z), axis=1, keepdims=True))
        o_ref[...] = (z - lse).astype(o_ref.dtype)


# ----------------------------------------------------------------------------
# Wrapper
# ----------------------------------------------------------------------------
def gcn_forward_pallas(params, x, a_hat, *, tm_target=256,
                       compute_dtype=jnp.bfloat16):
    Ws, bs = params["W"], params["b"]
    L = len(Ws)
    N, f_in = x.shape
    n_classes = Ws[-1].shape[1]

    tm, np_ = _pick_row_tile(N, tm_target)
    nblk = np_ // tm
    cbytes = jnp.dtype(compute_dtype).itemsize

    # Lane-dense feature padding + row padding to a multiple of TM (exact).
    f_pads = [_round_up(f_in, LANE)] + [_round_up(W.shape[1], LANE) for W in Ws]

    a_p = jnp.zeros((np_, np_), compute_dtype).at[:N, :N].set(
        a_hat.astype(compute_dtype))
    x_p = jnp.zeros((np_, f_pads[0]), compute_dtype).at[:N, :f_in].set(
        x.astype(compute_dtype))

    W_p, b_p = [], []
    for i, (W, b) in enumerate(zip(Ws, bs)):
        fi, fo = W.shape
        W_p.append(jnp.zeros((f_pads[i], f_pads[i + 1]), compute_dtype)
                   .at[:fi, :fo].set(W.astype(compute_dtype)))
        fill = -1e30 if i == L - 1 else 0.0  # padded classes vanish in softmax
        b_p.append(jnp.full((1, f_pads[i + 1]), fill, jnp.float32)
                   .at[0, :fo].set(b.astype(jnp.float32)))

    row_parallel = ("parallel",)

    # -------- initial feature transform HW_0 = X @ W_0 (row-tiled) ----------
    hw = pl.pallas_call(
        _transform_kernel,
        grid=(nblk,),
        in_specs=[pl.BlockSpec((tm, f_pads[0]), lambda i: (i, 0)),
                  pl.BlockSpec((f_pads[0], f_pads[1]), lambda i: (0, 0))],
        out_specs=pl.BlockSpec((tm, f_pads[1]), lambda i: (i, 0)),
        out_shape=jax.ShapeDtypeStruct((np_, f_pads[1]), compute_dtype),
        cost_estimate=pl.CostEstimate(
            flops=int(2 * np_ * f_pads[0] * f_pads[1]),
            transcendentals=0,
            bytes_accessed=int(cbytes * (np_ * f_pads[0]
                                         + f_pads[0] * f_pads[1]
                                         + np_ * f_pads[1]))),
        compiler_params=pltpu.CompilerParams(
            dimension_semantics=row_parallel,
            vmem_limit_bytes=_vmem_limit_bytes(
                2 * tm * f_pads[0] * cbytes,
                2 * f_pads[0] * f_pads[1] * cbytes,
                2 * tm * f_pads[1] * cbytes)),
    )(x_p, W_p[0])

    # -------- per layer: stream A row tiles; HW / W / b stay resident -------
    cur = hw
    for l in range(L):
        is_last = (l == L - 1)
        f_out = f_pads[l + 1]

        operands = [a_p, cur, b_p[l]]
        in_specs = [
            pl.BlockSpec((tm, np_), lambda i: (i, 0)),     # streamed A row tile
            pl.BlockSpec((np_, f_out), lambda i: (0, 0)),  # resident HW_l
            pl.BlockSpec((1, f_out), lambda i: (0, 0)),    # resident bias
        ]
        flops = 2 * np_ * np_ * f_out
        if not is_last:
            f_next = f_pads[l + 2]
            operands.append(W_p[l + 1])
            in_specs.append(pl.BlockSpec((f_out, f_next), lambda i: (0, 0)))
            out_shape = jax.ShapeDtypeStruct((np_, f_next), compute_dtype)
            out_spec = pl.BlockSpec((tm, f_next), lambda i: (i, 0))
            flops += 2 * np_ * f_out * f_next
            transcendentals = 0
            out_bytes = np_ * f_next * cbytes
        else:
            out_shape = jax.ShapeDtypeStruct((np_, f_out), jnp.float32)
            out_spec = pl.BlockSpec((tm, f_out), lambda i: (i, 0))
            transcendentals = 2 * np_ * f_out
            out_bytes = np_ * f_out * 4

        vmem = _vmem_limit_bytes(
            2 * tm * np_ * cbytes,           # double-buffered A row tile
            2 * np_ * f_out * cbytes,        # resident HW (conservative x2)
            2 * tm * f_pads[min(l + 2, L)] * 4,  # output tile
            sum(int(w.size) * cbytes for w in W_p))

        cur = pl.pallas_call(
            functools.partial(_aggregate_kernel, is_last=is_last),
            grid=(nblk,),
            in_specs=in_specs,
            out_specs=out_spec,
            out_shape=out_shape,
            cost_estimate=pl.CostEstimate(
                flops=int(flops),
                transcendentals=int(transcendentals),
                bytes_accessed=int(cbytes * (np_ * np_ + np_ * f_out)
                                   + out_bytes)),
            compiler_params=pltpu.CompilerParams(
                dimension_semantics=row_parallel,
                vmem_limit_bytes=vmem),
        )(*operands)

    return cur[:N, :n_classes]


# ----------------------------------------------------------------------------
# Graph-level preprocessing (once per graph, OUTSIDE the jitted forward):
#   A_hat = D^{-1/2} (A + I_remaining) D^{-1/2}   (PyG gcn_norm semantics:
#   self-loops of weight 1 are only added to nodes without an existing one).
#   Assumes edge_index describes a symmetric (undirected) graph.
# ----------------------------------------------------------------------------
def gcn_normalized_adjacency(edge_index, num_nodes, edge_weight=None):
    row, col = edge_index[0], edge_index[1]
    if edge_weight is None:
        edge_weight = jnp.ones(row.shape, jnp.float32)
    A = jnp.zeros((num_nodes, num_nodes), jnp.float32).at[row, col].add(edge_weight)
    diag = jnp.diagonal(A)
    A = A + jnp.diag(jnp.where(diag == 0.0, 1.0, 0.0))  # add_remaining_self_loops
    deg = A.sum(axis=0)  # in-degree; equals out-degree for the symmetric graph
    dinv = jnp.where(deg > 0, jax.lax.rsqrt(deg), 0.0)
    return dinv[:, None] * A * dinv[None, :]


# Pure-JAX references for verification.
def gcn_reference(params, x, a_hat):
    """Full-f32 reference (module semantics)."""
    h = x
    L = len(params["W"])
    for i, (W, b) in enumerate(zip(params["W"], params["b"])):
        h = a_hat @ (h @ W) + b[None, :]
        if i < L - 1:
            h = jax.nn.relu(h)
    return jax.nn.log_softmax(h, axis=1)


def gcn_reference_matched(params, x, a_hat, compute_dtype=jnp.bfloat16):
    """Reference mirroring the kernel's mixed precision (bf16 dot inputs,
    f32 accumulation, f32 bias/ReLU/log_softmax)."""
    cd = compute_dtype
    a = a_hat.astype(cd)
    hw = jnp.dot(x.astype(cd), params["W"][0].astype(cd),
                 preferred_element_type=jnp.float32).astype(cd)
    L = len(params["W"])
    agg = None
    for i in range(L):
        agg = jnp.dot(a, hw, preferred_element_type=jnp.float32) \
            + params["b"][i][None, :]
        if i < L - 1:
            h = jax.nn.relu(agg)
            hw = jnp.dot(h.astype(cd), params["W"][i + 1].astype(cd),
                         preferred_element_type=jnp.float32).astype(cd)
    return jax.nn.log_softmax(agg, axis=1)


def glorot(key, shape):
    fan_in, fan_out = shape[-2], shape[-1]
    lim = jnp.sqrt(6.0 / (fan_in + fan_out))
    return jax.random.uniform(key, shape, jnp.float32, -lim, lim)


if __name__ == "__main__":
    # Small synthetic graph: N=16 nodes, num_features=4, hidden=[64], classes=4
    N, F_IN, HIDDEN, N_CLASSES = 16, 4, (64,), 4

    key = jax.random.PRNGKey(0)
    k_x, k_e, *k_ws = jax.random.split(key, 2 + len(HIDDEN) + 1)

    x = jax.random.normal(k_x, (N, F_IN), jnp.float32)

    # Random undirected edges (symmetrized); self-loops handled by gcn_norm.
    src = jax.random.randint(k_e, (40,), 0, N)
    dst = jax.random.randint(jax.random.fold_in(k_e, 1), (40,), 0, N)
    edge_index = jnp.stack(
        [jnp.concatenate([src, dst]), jnp.concatenate([dst, src])], axis=0
    ).astype(jnp.int32)

    dims = [F_IN, *HIDDEN, N_CLASSES]
    params = {
        "W": [glorot(k, (fi, fo)) for k, fi, fo in zip(k_ws, dims[:-1], dims[1:])],
        "b": [jnp.zeros((fo,), jnp.float32) for fo in dims[1:]],
    }

    # Built once per graph, outside jit.
    a_hat = gcn_normalized_adjacency(edge_index, N)

    fwd = jax.jit(gcn_forward_pallas)
    out = jax.block_until_ready(fwd(params, x, a_hat))
    assert out.shape == (N, N_CLASSES)

    # 1) Tight check against a reference with the same bf16-input / f32-accum
    #    precision (isolates padding / tiling / fusion correctness).
    ref_matched = gcn_reference_matched(params, x, a_hat)
    assert jnp.allclose(out, ref_matched, atol=2e-3, rtol=2e-3), (
        "mismatch vs matched-precision reference: "
        f"{float(jnp.max(jnp.abs(out - ref_matched)))}")

    # 2) Looser sanity check against the full-f32 module semantics (bf16 MXU
    #    inputs introduce ~0.4% relative error on the logits).
    ref_f32 = gcn_reference(params, x, a_hat)
    assert jnp.allclose(out, ref_f32, atol=1e-1, rtol=1e-1), (
        "mismatch vs f32 reference: "
        f"{float(jnp.max(jnp.abs(out - ref_f32)))}")

    print("KERNEL_OK")
</pallas_src>

<mosaic_0001>
module attributes {stable_mosaic.version = 11 : i64} {
  func.func @_transform_kernel(%arg0: i32, %arg1: memref<8x128xbf16, #tpu.memory_space<vmem>>, %arg2: memref<128x128xbf16, #tpu.memory_space<vmem>>, %arg3: memref<8x128xbf16, #tpu.memory_space<vmem>>) attributes {dimension_semantics = [#tpu.dimension_semantics<parallel>], iteration_bounds = array<i64: 2>, scalar_prefetch = 0 : i64, scratch_operands = 0 : i64, tpu.core_type = #tpu.core_type<tc>, window_params = [{transform_indices = @transform_0, window_bounds = array<i64: 8, 128>}, {pipeline_mode = #tpu.pipeline_mode<synchronous>, transform_indices = @transform_1, window_bounds = array<i64: 128, 128>}, {transform_indices = @transform_2, window_bounds = array<i64: 8, 128>}]} {
    %c0 = arith.constant 0 : index
    %c0_0 = arith.constant 0 : index
    %0 = vector.load %arg1[%c0, %c0_0] : memref<8x128xbf16, #tpu.memory_space<vmem>>, vector<8x128xbf16>
    %c0_1 = arith.constant 0 : index
    %c0_2 = arith.constant 0 : index
    %1 = vector.load %arg2[%c0_1, %c0_2] : memref<128x128xbf16, #tpu.memory_space<vmem>>, vector<128x128xbf16>
    %cst = arith.constant dense<0.000000e+00> : vector<8x128xf32>
    %2 = tpu.matmul %0, %1, %cst {dimension_numbers = #tpu.dot_dimension_numbers<[1], [0], [0], [1], [0, 0, 1, 1], [], []>} : vector<8x128xbf16>, vector<128x128xbf16>, vector<8x128xf32> -> vector<8x128xf32>
    %3 = arith.truncf %2 : vector<8x128xf32> to vector<8x128xbf16>
    %c0_3 = arith.constant 0 : index
    %c0_4 = arith.constant 0 : index
    %4 = vector.load %arg3[%c0_3, %c0_4] : memref<8x128xbf16, #tpu.memory_space<vmem>>, vector<8x128xbf16>
    tpu.vector_store %arg3[%c0_3, %c0_4], %3 {strides = array<i32>} : memref<8x128xbf16, #tpu.memory_space<vmem>>, vector<8x128xbf16>,
    return
  }
  func.func @transform_0(%arg0: i32) -> (i32, i32) {
    %c0_i32 = arith.constant 0 : i32
    %c0_i32_0 = arith.constant 0 : i32
    return %arg0, %c0_i32 : i32, i32
  }
  func.func @transform_1(%arg0: i32) -> (i32, i32) {
    %c0_i32 = arith.constant 0 : i32
    %c0_i32_0 = arith.constant 0 : i32
    %c0_i32_1 = arith.constant 0 : i32
    return %c0_i32, %c0_i32_0 : i32, i32
  }
  func.func @transform_2(%arg0: i32) -> (i32, i32) {
    %c0_i32 = arith.constant 0 : i32
    %c0_i32_0 = arith.constant 0 : i32
    return %arg0, %c0_i32 : i32, i32
  }
}

module attributes {stable_mosaic.version = 11 : i64} {
  func.func @_aggregate_kernel(%arg0: i32, %arg1: memref<8x16xbf16, #tpu.memory_space<vmem>>, %arg2: memref<16x128xbf16, #tpu.memory_space<vmem>>, %arg3: memref<1x128xf32, #tpu.memory_space<vmem>>, %arg4: memref<128x128xbf16, #tpu.memory_space<vmem>>, %arg5: memref<8x128xbf16, #tpu.memory_space<vmem>>) attributes {dimension_semantics = [#tpu.dimension_semantics<parallel>], iteration_bounds = array<i64: 2>, scalar_prefetch = 0 : i64, scratch_operands = 0 : i64, tpu.core_type = #tpu.core_type<tc>, window_params = [{transform_indices = @transform_0, window_bounds = array<i64: 8, 16>}, {pipeline_mode = #tpu.pipeline_mode<synchronous>, transform_indices = @transform_1, window_bounds = array<i64: 16, 128>}, {pipeline_mode = #tpu.pipeline_mode<synchronous>, transform_indices = @transform_2, window_bounds = array<i64: 1, 128>}, {pipeline_mode = #tpu.pipeline_mode<synchronous>, transform_indices = @transform_3, window_bounds = array<i64: 128, 128>}, {transform_indices = @transform_4, window_bounds = array<i64: 8, 128>}]} {
    %c0 = arith.constant 0 : index
    %c0_0 = arith.constant 0 : index
    %0 = vector.load %arg1[%c0, %c0_0] : memref<8x16xbf16, #tpu.memory_space<vmem>>, vector<8x16xbf16>
    %c0_1 = arith.constant 0 : index
    %c0_2 = arith.constant 0 : index
    %1 = vector.load %arg2[%c0_1, %c0_2] : memref<16x128xbf16, #tpu.memory_space<vmem>>, vector<16x128xbf16>
    %cst = arith.constant dense<0.000000e+00> : vector<8x128xf32>
    %2 = tpu.matmul %0, %1, %cst {dimension_numbers = #tpu.dot_dimension_numbers<[1], [0], [0], [1], [0, 0, 1, 1], [], []>} : vector<8x16xbf16>, vector<16x128xbf16>, vector<8x128xf32> -> vector<8x128xf32>
    %c0_3 = arith.constant 0 : index
    %c0_4 = arith.constant 0 : index
    %3 = vector.load %arg3[%c0_3, %c0_4] : memref<1x128xf32, #tpu.memory_space<vmem>>, vector<1x128xf32>
    %4 = vector.broadcast %3 : vector<1x128xf32> to vector<8x128xf32>
    %5 = arith.addf %2, %4 : vector<8x128xf32>
    %cst_5 = arith.constant 0.000000e+00 : f32
    %6 = vector.broadcast %cst_5 : f32 to vector<8x128xf32>
    %7 = arith.maximumf %5, %6 : vector<8x128xf32>
    %8 = arith.truncf %7 : vector<8x128xf32> to vector<8x128xbf16>
    %c0_6 = arith.constant 0 : index
    %c0_7 = arith.constant 0 : index
    %9 = vector.load %arg4[%c0_6, %c0_7] : memref<128x128xbf16, #tpu.memory_space<vmem>>, vector<128x128xbf16>
    %cst_8 = arith.constant dense<0.000000e+00> : vector<8x128xf32>
    %10 = tpu.matmul %8, %9, %cst_8 {dimension_numbers = #tpu.dot_dimension_numbers<[1], [0], [0], [1], [0, 0, 1, 1], [], []>} : vector<8x128xbf16>, vector<128x128xbf16>, vector<8x128xf32> -> vector<8x128xf32>
    %11 = arith.truncf %10 : vector<8x128xf32> to vector<8x128xbf16>
    %c0_9 = arith.constant 0 : index
    %c0_10 = arith.constant 0 : index
    %12 = vector.load %arg5[%c0_9, %c0_10] : memref<8x128xbf16, #tpu.memory_space<vmem>>, vector<8x128xbf16>
    tpu.vector_store %arg5[%c0_9, %c0_10], %11 {strides = array<i32>} : memref<8x128xbf16, #tpu.memory_space<vmem>>, vector<8x128xbf16>,
    return
  }
  func.func @transform_0(%arg0: i32) -> (i32, i32) {
    %c0_i32 = arith.constant 0 : i32
    %c0_i32_0 = arith.constant 0 : i32
    return %arg0, %c0_i32 : i32, i32
  }
  func.func @transform_1(%arg0: i32) -> (i32, i32) {
    %c0_i32 = arith.constant 0 : i32
    %c0_i32_0 = arith.constant 0 : i32
    %c0_i32_1 = arith.constant 0 : i32
    return %c0_i32, %c0_i32_0 : i32, i32
  }
  func.func @transform_2(%arg0: i32) -> (i32, i32) {
    %c0_i32 = arith.constant 0 : i32
    %c0_i32_0 = arith.constant 0 : i32
    %c0_i32_1 = arith.constant 0 : i32
    return %c0_i32, %c0_i32_0 : i32, i32
  }
  func.func @transform_3(%arg0: i32) -> (i32, i32) {
    %c0_i32 = arith.constant 0 : i32
    %c0_i32_0 = arith.constant 0 : i32
    %c0_i32_1 = arith.constant 0 : i32
    return %c0_i32, %c0_i32_0 : i32, i32
  }
  func.func @transform_4(%arg0: i32) -> (i32, i32) {
    %c0_i32 = arith.constant 0 : i32
    %c0_i32_0 = arith.constant 0 : i32
    return %arg0, %c0_i32 : i32, i32
  }
}

module attributes {stable_mosaic.version = 11 : i64} {
  func.func @_aggregate_kernel(%arg0: i32, %arg1: memref<8x16xbf16, #tpu.memory_space<vmem>>, %arg2: memref<16x128xbf16, #tpu.memory_space<vmem>>, %arg3: memref<1x128xf32, #tpu.memory_space<vmem>>, %arg4: memref<8x128xf32, #tpu.memory_space<vmem>>) attributes {dimension_semantics = [#tpu.dimension_semantics<parallel>], iteration_bounds = array<i64: 2>, scalar_prefetch = 0 : i64, scratch_operands = 0 : i64, tpu.core_type = #tpu.core_type<tc>, window_params = [{transform_indices = @transform_0, window_bounds = array<i64: 8, 16>}, {pipeline_mode = #tpu.pipeline_mode<synchronous>, transform_indices = @transform_1, window_bounds = array<i64: 16, 128>}, {pipeline_mode = #tpu.pipeline_mode<synchronous>, transform_indices = @transform_2, window_bounds = array<i64: 1, 128>}, {transform_indices = @transform_3, window_bounds = array<i64: 8, 128>}]} {
    %c0 = arith.constant 0 : index
    %c0_0 = arith.constant 0 : index
    %0 = vector.load %arg1[%c0, %c0_0] : memref<8x16xbf16, #tpu.memory_space<vmem>>, vector<8x16xbf16>
    %c0_1 = arith.constant 0 : index
    %c0_2 = arith.constant 0 : index
    %1 = vector.load %arg2[%c0_1, %c0_2] : memref<16x128xbf16, #tpu.memory_space<vmem>>, vector<16x128xbf16>
    %cst = arith.constant dense<0.000000e+00> : vector<8x128xf32>
    %2 = tpu.matmul %0, %1, %cst {dimension_numbers = #tpu.dot_dimension_numbers<[1], [0], [0], [1], [0, 0, 1, 1], [], []>} : vector<8x16xbf16>, vector<16x128xbf16>, vector<8x128xf32> -> vector<8x128xf32>
    %c0_3 = arith.constant 0 : index
    %c0_4 = arith.constant 0 : index
    %3 = vector.load %arg3[%c0_3, %c0_4] : memref<1x128xf32, #tpu.memory_space<vmem>>, vector<1x128xf32>
    %4 = vector.broadcast %3 : vector<1x128xf32> to vector<8x128xf32>
    %5 = arith.addf %2, %4 : vector<8x128xf32>
    %cst_5 = arith.constant dense<0xFF800000> : vector<8xf32>
    %6 = vector.multi_reduction <maximumf>, %5, %cst_5 [1] : vector<8x128xf32> to vector<8xf32>
    %7 = vector.shape_cast %6 : vector<8xf32> to vector<8x1xf32>
    %8 = vector.broadcast %7 : vector<8x1xf32> to vector<8x128xf32>
    %9 = arith.subf %5, %8 : vector<8x128xf32>
    %10 = math.exp %9 : vector<8x128xf32>
    %cst_6 = arith.constant dense<0.000000e+00> : vector<8xf32>
    %11 = vector.multi_reduction <add>, %10, %cst_6 [1] : vector<8x128xf32> to vector<8xf32>
    %12 = vector.shape_cast %11 : vector<8xf32> to vector<8x1xf32>
    %13 = math.log %12 : vector<8x1xf32>
    %14 = vector.broadcast %13 : vector<8x1xf32> to vector<8x128xf32>
    %15 = arith.subf %9, %14 : vector<8x128xf32>
    %c0_7 = arith.constant 0 : index
    %c0_8 = arith.constant 0 : index
    %16 = vector.load %arg4[%c0_7, %c0_8] : memref<8x128xf32, #tpu.memory_space<vmem>>, vector<8x128xf32>
    tpu.vector_store %arg4[%c0_7, %c0_8], %15 {strides = array<i32>} : memref<8x128xf32, #tpu.memory_space<vmem>>, vector<8x128xf32>,
    return
  }
  func.func @transform_0(%arg0: i32) -> (i32, i32) {
    %c0_i32 = arith.constant 0 : i32
    %c0_i32_0 = arith.constant 0 : i32
    return %arg0, %c0_i32 : i32, i32
  }
  func.func @transform_1(%arg0: i32) -> (i32, i32) {
    %c0_i32 = arith.constant 0 : i32
    %c0_i32_0 = arith.constant 0 : i32
    %c0_i32_1 = arith.constant 0 : i32
    return %c0_i32, %c0_i32_0 : i32, i32
  }
  func.func @transform_2(%arg0: i32) -> (i32, i32) {
    %c0_i32 = arith.constant 0 : i32
    %c0_i32_0 = arith.constant 0 : i32
    %c0_i32_1 = arith.constant 0 : i32
    return %c0_i32, %c0_i32_0 : i32, i32
  }
  func.func @transform_3(%arg0: i32) -> (i32, i32) {
    %c0_i32 = arith.constant 0 : i32
    %c0_i32_0 = arith.constant 0 : i32
    return %arg0, %c0_i32 : i32, i32
  }
}

</mosaic_0001>

<llo_original>
// kernel: gcn_forward_pallas.5
$region0: #{gcn_forward_pallas.5}
  #allocation0 [shape = 'u32[]', space=smem, size = 0x4, offset = 0x4, fixed_abs, tag = 'smem constant byte address 0x4 - core index']
  #allocation1 [shape = 'u32[144,128]{1,0:T(1,128)}', space=vmem, size = 0x12000, scoped, tag = 'internal scratch']
  %s0 = inlined_call_operand.vmem [shape: bf16[16,16], index: 0, kind: input, shape index: {}]
  %s1 = inlined_call_operand.vmem [shape: bf16[16,128], index: 1, kind: input, shape index: {}]
  %s2 = inlined_call_operand.vmem [shape: f32[1,128], index: 2, kind: input, shape index: {}]
  %s3 = inlined_call_operand.vmem [shape: f32[16,128], index: 3, kind: output, shape index: {}]
  %s4 = sld [smem:[#allocation0]]
  $region45: #{gcn_forward_pallas.5} parent=0
    _
  %s6 = ssub.s32 1, %s4
  %s7 = scalar_select 0, %s6, %s4
  loop: start=0, step=1, limit=4
  $region2: #{gcn_forward_pallas.5} parent=0 // loop_pre_header
    _
  $region3: #{gcn_forward_pallas.5} parent=0 // loop_header
    %s9 = sphi 0, %s13
    %p10 = scmp.ge.s32.totalorder %s9, 4
    %s19 = sphi 0, %s21
    %s22 = sphi 0, %s19
    %s23 = sphi 0, %s22
    %s39 = sphi 0, %s23
    %s43 = sphi 0, %s43
    %s45 = sphi 0, %s43
    %s46 = sphi 0, %s45
    %s60 = sphi 0, %s46
    %s64 = sphi 0, %s64
    %s66 = sphi 0, %s64
    %s67 = sphi 0, %s66
    %s81 = sphi 0, %s67
    %s87 = sphi 0, %s89
    %s90 = sphi 0, %s87
    %s91 = sphi 0, %s90
    %s107 = sphi 0, %s91
  $region4: #{gcn_forward_pallas.5} parent=0 // loop_header_branch
    %12 = sbr.rel (%p10) target = $region8
  $region5: #{gcn_forward_pallas.5} parent=0 // loop_body
    %s14 = ssub.s32 %s9, 1
    %s15 = ssub.s32 %s9, 2
    %s16 = sadd.s32 %s9, 1
    %s17 = ssub.s32 %s9, %s16
    %p18 = scmp.eq.s32.totalorder %s17, 0
    %s20 = sadd.s32 %s19, 1
    %s21 = scalar_select %p18, %s19, %s20
    %p24 = pneg %p18
    %p25 = scmp.eq.s32.totalorder %s9, 1
    %p26 = por %p24, %p25
    %p27 = scmp.ne.s32.totalorder %s19, %s22
    %p28 = scmp.eq.s32.totalorder %s9, 0
    %p29 = por %p27, %p28
    %p30 = scmp.ne.s32.totalorder %s19, %s22
    %p31 = scmp.eq.s32.totalorder %s14, 1
    %p32 = por %p30, %p31
    %p33 = scmp.ne.s32.totalorder %s22, %s23
    %p34 = scmp.eq.s32.totalorder %s14, 0
    %p35 = por %p33, %p34
    %p36 = scmp.ne.s32.totalorder %s22, %s23
    %p37 = scmp.eq.s32.totalorder %s15, 1
    %p38 = por %p36, %p37
    %p40 = scmp.ne.s32.totalorder %s23, %s39
    %p41 = scmp.eq.s32.totalorder %s15, 0
    %p42 = por %p40, %p41
    %s44 = sadd.s32 %s43, 1
    %p47 = scmp.eq.s32.totalorder %s9, 1
    %p48 = scmp.ne.s32.totalorder %s43, %s45
    %p49 = scmp.eq.s32.totalorder %s9, 0
    %p50 = por %p48, %p49
    %p51 = scmp.ne.s32.totalorder %s43, %s45
    %p52 = scmp.eq.s32.totalorder %s14, 1
    %p53 = por %p51, %p52
    %p54 = scmp.ne.s32.totalorder %s45, %s46
    %p55 = scmp.eq.s32.totalorder %s14, 0
    %p56 = por %p54, %p55
    %p57 = scmp.ne.s32.totalorder %s45, %s46
    %p58 = scmp.eq.s32.totalorder %s15, 1
    %p59 = por %p57, %p58
    %p61 = scmp.ne.s32.totalorder %s46, %s60
    %p62 = scmp.eq.s32.totalorder %s15, 0
    %p63 = por %p61, %p62
    %s65 = sadd.s32 %s64, 1
    %p68 = scmp.eq.s32.totalorder %s9, 1
    %p69 = scmp.ne.s32.totalorder %s64, %s66
    %p70 = scmp.eq.s32.totalorder %s9, 0
    %p71 = por %p69, %p70
    %p72 = scmp.ne.s32.totalorder %s64, %s66
    %p73 = scmp.eq.s32.totalorder %s14, 1
    %p74 = por %p72, %p73
    %p75 = scmp.ne.s32.totalorder %s66, %s67
    %p76 = scmp.eq.s32.totalorder %s14, 0
    %p77 = por %p75, %p76
    %p78 = scmp.ne.s32.totalorder %s66, %s67
    %p79 = scmp.eq.s32.totalorder %s15, 1
    %p80 = por %p78, %p79
    %p82 = scmp.ne.s32.totalorder %s67, %s81
    %p83 = scmp.eq.s32.totalorder %s15, 0
    %p84 = por %p82, %p83
    %s85 = ssub.s32 %s9, %s16
    %p86 = scmp.eq.s32.totalorder %s85, 0
    %s88 = sadd.s32 %s87, 1
    %s89 = scalar_select %p86, %s87, %s88
    %p92 = pneg %p86
    %p93 = scmp.eq.s32.totalorder %s9, 1
    %p94 = por %p92, %p93
    %p95 = scmp.ne.s32.totalorder %s87, %s90
    %p96 = scmp.eq.s32.totalorder %s9, 0
    %p97 = por %p95, %p96
    %p98 = scmp.ne.s32.totalorder %s87, %s90
    %p99 = scmp.eq.s32.totalorder %s14, 1
    %p100 = por %p98, %p99
    %p101 = scmp.ne.s32.totalorder %s90, %s91
    %p102 = scmp.eq.s32.totalorder %s14, 0
    %p103 = por %p101, %p102
    %p104 = scmp.ne.s32.totalorder %s90, %s91
    %p105 = scmp.eq.s32.totalorder %s15, 1
    %p106 = por %p104, %p105
    %p108 = scmp.ne.s32.totalorder %s91, %s107
    %p109 = scmp.eq.s32.totalorder %s15, 0
    %p110 = por %p108, %p109
    %p111 = scmp.le.s32.totalorder 1, %s9
    %p112 = scmp.lt.s32.totalorder %s9, 3
    %p113 = pnand %p111, %p112
    %p114 = pneg %p113
    // Predicated region
    $region9: #{gcn_forward_pallas.5} parent=5 // pred_check
      _
    $region10: #{gcn_forward_pallas.5} parent=5 // pred_check_branch
      %116 = sbr.rel (%p113) target = $region12
    $region11: #{gcn_forward_pallas.5} parent=5 // pred_region
      %s117 = ssub.s32 %s9, 1
      // Predicated region
      $region13: #{gcn_forward_pallas.5} parent=11 // pred_check
        %p118 = pneg %p56
      $region14: #{gcn_forward_pallas.5} parent=11 // pred_check_branch
        %120 = sbr.rel (%p118) target = $region16
      $region15: #{gcn_forward_pallas.5} parent=11 // pred_region
        _
      $region16: #{gcn_forward_pallas.5} parent=11 // pred_fallthru
        _
      // Predicated region
      $region17: #{gcn_forward_pallas.5} parent=11 // pred_check
        %p121 = pneg %p77
      $region18: #{gcn_forward_pallas.5} parent=11 // pred_check_branch
        %123 = sbr.rel (%p121) target = $region20
      $region19: #{gcn_forward_pallas.5} parent=11 // pred_region
        _
      $region20: #{gcn_forward_pallas.5} parent=11 // pred_fallthru
        _
    $region12: #{gcn_forward_pallas.5} parent=5 // pred_fallthru
      _
    %p124 = scmp.lt.s32.totalorder %s9, 2
    // Predicated region
    $region21: #{gcn_forward_pallas.5} parent=5 // pred_check
      %p125 = pneg %p124
    $region22: #{gcn_forward_pallas.5} parent=5 // pred_check_branch
      %127 = sbr.rel (%p125) target = $region24
    $region23: #{gcn_forward_pallas.5} parent=5 // pred_region
      // Predicated region
      $region25: #{gcn_forward_pallas.5} parent=23 // pred_check
        %p128 = pneg %p29
      $region26: #{gcn_forward_pallas.5} parent=23 // pred_check_branch
        %130 = sbr.rel (%p128) target = $region28
      $region27: #{gcn_forward_pallas.5} parent=23 // pred_region
        %p131 = scmp.lt.s32.totalorder %s9, 1
        %s132 = scalar_select %p131, %s9, 1
        %s133 = smul.addr %s132, 4
        %s134 = scalar_lea.vmem %s0, %s133
      $region28: #{gcn_forward_pallas.5} parent=23 // pred_fallthru
        _
    $region24: #{gcn_forward_pallas.5} parent=5 // pred_fallthru
      _
    %p135 = scmp.le.s32.totalorder 1, %s9
    %p136 = scmp.lt.s32.totalorder %s9, 3
    %p137 = pnand %p135, %p136
    %p138 = pneg %p137
    // Predicated region
    $region29: #{gcn_forward_pallas.5} parent=5 // pred_check
      _
    $region30: #{gcn_forward_pallas.5} parent=5 // pred_check_branch
      %140 = sbr.rel (%p137) target = $region32
    $region31: #{gcn_forward_pallas.5} parent=5 // pred_region
      %s141 = ssub.s32 %s9, 1
      %p142 = scmp.lt.s32.totalorder %s14, 1
      %s143 = scalar_select %p142, %s14, 1
      %s144 = smul.addr %s143, 4
      %s145 = scalar_lea.vmem %s0, %s144
      %p146 = pneg %p35
      %p147 = pneg %p32
      %p148 = pneg %p56
      %p149 = pneg %p53
      %p150 = pneg %p77
      %p151 = pneg %p74
      %p152 = pneg %p103
      %p153 = pneg %p100
      %p154 = scmp.lt.s32.totalorder %s14, 1
      %s155 = scalar_select %p154, %s14, 1
      %s156 = smul.addr %s155, 8
      %s157 = scalar_lea.vmem %s3, %s156
      %p158 = scmp.lt.s32.totalorder %s14, 1
      %s159 = scalar_select %p158, %s14, 1
      %s160 = smul.addr %s159, 4
      %s161 = scalar_lea.vmem %s0, %s160
      %p162 = scmp.lt.s32.totalorder %s14, 1
      %s163 = scalar_select %p162, %s14, 1
      %s164 = smul.addr %s163, 8
      %s165 = scalar_lea.vmem %s3, %s164
      %v167 = vld [vmem:[%s161] sm:$0xf]
      %v168 = vld [vmem:[%s1] sm:$0xf]
      %v169 = vld [vmem:[%s1 + $0x4] sm:$0xf]
      %v170 = vld [vmem:[%s2] sm:$0x1]
      %v172 = vlaneseq
      %v173 = vshrl.u32 %v172, 7
      %v174 = vsub.s32 0, %v173
      %v175 = vrot.slane %v170, %v174
      %v179 = vunpack.c.l.b16 %v168
      %v180 = vunpack.c.l.b16 %v169
      %v181 = vpack.c.b16 %v180, %v179
      %vm183 = vcmask 130048
      %v185 = vsel %vm183, %v167, 0
      %187 = vmatprep.subr.bf16.mxu0 0
      %188 = vmatpush1.bf16.msra.mxu0 %v181
      %189 = vmatprep.subr.bf16.mxu0 0
      %190 = vmatpush1.bf16.msra.mxu0 0
      %191 = vmatprep.subr.bf16.mxu0 0
      %192 = vmatpush1.bf16.msra.mxu0 0
      %193 = vmatprep.subr.bf16.mxu0 0
      %194 = vmatpush1.bf16.msra.mxu0 0
      %195 = vmatprep.subr.bf16.mxu0 0
      %196 = vmatpush1.bf16.msra.mxu0 0
      %197 = vmatprep.subr.bf16.mxu0 0
      %198 = vmatpush1.bf16.msra.mxu0 0
      %199 = vmatprep.subr.bf16.mxu0 0
      %200 = vmatpush1.bf16.msra.mxu0 0
      %201 = vmatprep.subr.bf16.mxu0 0
      %202 = vmatpush1.bf16.msra.mxu0 0
      %203 = vmatprep.subr.bf16.mxu0 0
      %204 = vmatpush1.bf16.msra.mxu0 0
      %205 = vmatprep.subr.bf16.mxu0 0
      %206 = vmatpush1.bf16.msra.mxu0 0
      %207 = vmatprep.subr.bf16.mxu0 0
      %208 = vmatpush1.bf16.msra.mxu0 0
      %209 = vmatprep.subr.bf16.mxu0 0
      %210 = vmatpush1.bf16.msra.mxu0 0
      %211 = vmatprep.subr.bf16.mxu0 0
      %212 = vmatpush1.bf16.msra.mxu0 0
      %213 = vmatprep.subr.bf16.mxu0 0
      %214 = vmatpush1.bf16.msra.mxu0 0
      %215 = vmatprep.subr.bf16.mxu0 0
      %216 = vmatpush1.bf16.msra.mxu0 0
      %217 = vmatprep.subr.bf16.mxu0 0
      %218 = vmatpush1.bf16.msra.mxu0 0
      %219 = vmatprep.mubr.bf16.mxu0 0
      %220 = vmatmul.mubr.bf16.gmra.mrb[0].mxu0 %v185
      %v221 = vpop.f32.mrb[0].mxu0
      %v222 = vadd.f32 %v175, %v221
      %v223 = vpop.f32.mrb[0].mxu0
      %v224 = vpop.f32.mrb[0].mxu0
      %v225 = vpop.f32.mrb[0].mxu0
      %226 = vdwg.mxu0
      %227 = vmax.xlane.f32.xlu0 %v222
      %v228 = vpop.xlane.xlu0 %227
      %v229 = vsub.f32 %v222, %v228
      %v230 = vmul.f32 %v229, 1.442695
      %v231 = vpow.pop %v230
      %232 = vadd.xlane.f32.xlu0 %v231
      %v233 = vpop.xlane.xlu0 %232
      %v234 = vlog2.pop %v233
      %v235 = vmul.f32 %v234, 0.6931472
      %v236 = vsub.f32 %v229, %v235
      %237 = vst [vmem:[%s165] sm:$0xff] %v236
      %p238 = scmp.lt.s32.totalorder %s14, 1
      %s239 = scalar_select %p238, %s14, 1
      %s240 = smul.addr %s239, 8
      %s241 = scalar_lea.vmem %s3, %s240
      // Predicated region
      $region33: #{gcn_forward_pallas.5} parent=31 // pred_check
        %p242 = pneg %p100
      $region34: #{gcn_forward_pallas.5} parent=31 // pred_check_branch
        %244 = sbr.rel (%p242) target = $region36
      $region35: #{gcn_forward_pallas.5} parent=31 // pred_region
        _
      $region36: #{gcn_forward_pallas.5} parent=31 // pred_fallthru
        _
    $region32: #{gcn_forward_pallas.5} parent=5 // pred_fallthru
      _
    %p245 = scmp.le.s32.totalorder 2, %s9
    // Predicated region
    $region37: #{gcn_forward_pallas.5} parent=5 // pred_check
      %p246 = pneg %p245
    $region38: #{gcn_forward_pallas.5} parent=5 // pred_check_branch
      %248 = sbr.rel (%p246) target = $region40
    $region39: #{gcn_forward_pallas.5} parent=5 // pred_region
      %s249 = ssub.s32 %s9, 2
      // Predicated region
      $region41: #{gcn_forward_pallas.5} parent=39 // pred_check
        %p250 = pneg %p106
      $region42: #{gcn_forward_pallas.5} parent=39 // pred_check_branch
        %252 = sbr.rel (%p250) target = $region44
      $region43: #{gcn_forward_pallas.5} parent=39 // pred_region
        %p253 = scmp.lt.s32.totalorder %s15, 1
        %s254 = scalar_select %p253, %s15, 1
        %s255 = smul.addr %s254, 8
        %s256 = scalar_lea.vmem %s3, %s255
      $region44: #{gcn_forward_pallas.5} parent=39 // pred_fallthru
        _
    $region40: #{gcn_forward_pallas.5} parent=5 // pred_fallthru
      _
  $region6: #{gcn_forward_pallas.5} parent=0 // loop_footer
    %s13 = sadd.s32 1, %s9
  $region7: #{gcn_forward_pallas.5} parent=0 // loop_footer_branch
    %8 = sbr.rel target = $region3
  $region8: #{gcn_forward_pallas.5} parent=0 // loop_exit
    _

// kernel: gcn_forward_pallas.3
$region0: #{gcn_forward_pallas.3}
  #allocation0 [shape = 'u32[]', space=smem, size = 0x4, offset = 0x4, fixed_abs, tag = 'smem constant byte address 0x4 - core index']
  #allocation1 [shape = 'u32[144,128]{1,0:T(1,128)}', space=vmem, size = 0x12000, scoped, tag = 'internal scratch']
  %s0 = inlined_call_operand.vmem [shape: bf16[16,128], index: 0, kind: input, shape index: {}]
  %s1 = inlined_call_operand.vmem [shape: bf16[128,128], index: 1, kind: input, shape index: {}]
  %s2 = inlined_call_operand.vmem [shape: bf16[16,128], index: 2, kind: output, shape index: {}]
  %s3 = sld [smem:[#allocation0]]
  $region41: #{gcn_forward_pallas.3} parent=0
    _
  %s5 = ssub.s32 1, %s3
  %s6 = scalar_select 0, %s5, %s3
  loop: start=0, step=1, limit=4
  $region2: #{gcn_forward_pallas.3} parent=0 // loop_pre_header
    _
  $region3: #{gcn_forward_pallas.3} parent=0 // loop_header
    %s8 = sphi 0, %s12
    %p9 = scmp.ge.s32.totalorder %s8, 4
    %s18 = sphi 0, %s20
    %s21 = sphi 0, %s18
    %s22 = sphi 0, %s21
    %s38 = sphi 0, %s22
    %s42 = sphi 0, %s42
    %s44 = sphi 0, %s42
    %s45 = sphi 0, %s44
    %s59 = sphi 0, %s45
    %s65 = sphi 0, %s67
    %s68 = sphi 0, %s65
    %s69 = sphi 0, %s68
    %s85 = sphi 0, %s69
  $region4: #{gcn_forward_pallas.3} parent=0 // loop_header_branch
    %11 = sbr.rel (%p9) target = $region8
  $region5: #{gcn_forward_pallas.3} parent=0 // loop_body
    %s13 = ssub.s32 %s8, 1
    %s14 = ssub.s32 %s8, 2
    %s15 = sadd.s32 %s8, 1
    %s16 = ssub.s32 %s8, %s15
    %p17 = scmp.eq.s32.totalorder %s16, 0
    %s19 = sadd.s32 %s18, 1
    %s20 = scalar_select %p17, %s18, %s19
    %p23 = pneg %p17
    %p24 = scmp.eq.s32.totalorder %s8, 1
    %p25 = por %p23, %p24
    %p26 = scmp.ne.s32.totalorder %s18, %s21
    %p27 = scmp.eq.s32.totalorder %s8, 0
    %p28 = por %p26, %p27
    %p29 = scmp.ne.s32.totalorder %s18, %s21
    %p30 = scmp.eq.s32.totalorder %s13, 1
    %p31 = por %p29, %p30
    %p32 = scmp.ne.s32.totalorder %s21, %s22
    %p33 = scmp.eq.s32.totalorder %s13, 0
    %p34 = por %p32, %p33
    %p35 = scmp.ne.s32.totalorder %s21, %s22
    %p36 = scmp.eq.s32.totalorder %s14, 1
    %p37 = por %p35, %p36
    %p39 = scmp.ne.s32.totalorder %s22, %s38
    %p40 = scmp.eq.s32.totalorder %s14, 0
    %p41 = por %p39, %p40
    %s43 = sadd.s32 %s42, 1
    %p46 = scmp.eq.s32.totalorder %s8, 1
    %p47 = scmp.ne.s32.totalorder %s42, %s44
    %p48 = scmp.eq.s32.totalorder %s8, 0
    %p49 = por %p47, %p48
    %p50 = scmp.ne.s32.totalorder %s42, %s44
    %p51 = scmp.eq.s32.totalorder %s13, 1
    %p52 = por %p50, %p51
    %p53 = scmp.ne.s32.totalorder %s44, %s45
    %p54 = scmp.eq.s32.totalorder %s13, 0
    %p55 = por %p53, %p54
    %p56 = scmp.ne.s32.totalorder %s44, %s45
    %p57 = scmp.eq.s32.totalorder %s14, 1
    %p58 = por %p56, %p57
    %p60 = scmp.ne.s32.totalorder %s45, %s59
    %p61 = scmp.eq.s32.totalorder %s14, 0
    %p62 = por %p60, %p61
    %s63 = ssub.s32 %s8, %s15
    %p64 = scmp.eq.s32.totalorder %s63, 0
    %s66 = sadd.s32 %s65, 1
    %s67 = scalar_select %p64, %s65, %s66
    %p70 = pneg %p64
    %p71 = scmp.eq.s32.totalorder %s8, 1
    %p72 = por %p70, %p71
    %p73 = scmp.ne.s32.totalorder %s65, %s68
    %p74 = scmp.eq.s32.totalorder %s8, 0
    %p75 = por %p73, %p74
    %p76 = scmp.ne.s32.totalorder %s65, %s68
    %p77 = scmp.eq.s32.totalorder %s13, 1
    %p78 = por %p76, %p77
    %p79 = scmp.ne.s32.totalorder %s68, %s69
    %p80 = scmp.eq.s32.totalorder %s13, 0
    %p81 = por %p79, %p80
    %p82 = scmp.ne.s32.totalorder %s68, %s69
    %p83 = scmp.eq.s32.totalorder %s14, 1
    %p84 = por %p82, %p83
    %p86 = scmp.ne.s32.totalorder %s69, %s85
    %p87 = scmp.eq.s32.totalorder %s14, 0
    %p88 = por %p86, %p87
    %p89 = scmp.le.s32.totalorder 1, %s8
    %p90 = scmp.lt.s32.totalorder %s8, 3
    %p91 = pnand %p89, %p90
    %p92 = pneg %p91
    // Predicated region
    $region9: #{gcn_forward_pallas.3} parent=5 // pred_check
      _
    $region10: #{gcn_forward_pallas.3} parent=5 // pred_check_branch
      %94 = sbr.rel (%p91) target = $region12
    $region11: #{gcn_forward_pallas.3} parent=5 // pred_region
      %s95 = ssub.s32 %s8, 1
      // Predicated region
      $region13: #{gcn_forward_pallas.3} parent=11 // pred_check
        %p96 = pneg %p55
      $region14: #{gcn_forward_pallas.3} parent=11 // pred_check_branch
        %98 = sbr.rel (%p96) target = $region16
      $region15: #{gcn_forward_pallas.3} parent=11 // pred_region
        _
      $region16: #{gcn_forward_pallas.3} parent=11 // pred_fallthru
        _
    $region12: #{gcn_forward_pallas.3} parent=5 // pred_fallthru
      _
    %p99 = scmp.lt.s32.totalorder %s8, 2
    // Predicated region
    $region17: #{gcn_forward_pallas.3} parent=5 // pred_check
      %p100 = pneg %p99
    $region18: #{gcn_forward_pallas.3} parent=5 // pred_check_branch
      %102 = sbr.rel (%p100) target = $region20
    $region19: #{gcn_forward_pallas.3} parent=5 // pred_region
      // Predicated region
      $region21: #{gcn_forward_pallas.3} parent=19 // pred_check
        %p103 = pneg %p28
      $region22: #{gcn_forward_pallas.3} parent=19 // pred_check_branch
        %105 = sbr.rel (%p103) target = $region24
      $region23: #{gcn_forward_pallas.3} parent=19 // pred_region
        %p106 = scmp.lt.s32.totalorder %s8, 1
        %s107 = scalar_select %p106, %s8, 1
        %s108 = smul.addr %s107, 4
        %s109 = scalar_lea.vmem %s0, %s108
      $region24: #{gcn_forward_pallas.3} parent=19 // pred_fallthru
        _
    $region20: #{gcn_forward_pallas.3} parent=5 // pred_fallthru
      _
    %p110 = scmp.le.s32.totalorder 1, %s8
    %p111 = scmp.lt.s32.totalorder %s8, 3
    %p112 = pnand %p110, %p111
    %p113 = pneg %p112
    // Predicated region
    $region25: #{gcn_forward_pallas.3} parent=5 // pred_check
      _
    $region26: #{gcn_forward_pallas.3} parent=5 // pred_check_branch
      %115 = sbr.rel (%p112) target = $region28
    $region27: #{gcn_forward_pallas.3} parent=5 // pred_region
      %s116 = ssub.s32 %s8, 1
      %p117 = scmp.lt.s32.totalorder %s13, 1
      %s118 = scalar_select %p117, %s13, 1
      %s119 = smul.addr %s118, 4
      %s120 = scalar_lea.vmem %s0, %s119
      %p121 = pneg %p34
      %p122 = pneg %p31
      %p123 = pneg %p55
      %p124 = pneg %p52
      %p125 = pneg %p81
      %p126 = pneg %p78
      %p127 = scmp.lt.s32.totalorder %s13, 1
      %s128 = scalar_select %p127, %s13, 1
      %s129 = smul.addr %s128, 4
      %s130 = scalar_lea.vmem %s2, %s129
      %p131 = scmp.lt.s32.totalorder %s13, 1
      %s132 = scalar_select %p131, %s13, 1
      %s133 = smul.addr %s132, 4
      %s134 = scalar_lea.vmem %s0, %s133
      %p135 = scmp.lt.s32.totalorder %s13, 1
      %s136 = scalar_select %p135, %s13, 1
      %s137 = smul.addr %s136, 4
      %s138 = scalar_lea.vmem %s2, %s137
      %v140 = vld [vmem:[%s134] sm:$0xf]
      %v141 = vld [vmem:[%s1] sm:$0xf]
      %v142 = vld [vmem:[%s1 + $0x4] sm:$0xf]
      %v143 = vld [vmem:[%s1 + $0x8] sm:$0xf]
      %v144 = vld [vmem:[%s1 + $0xc] sm:$0xf]
      %v145 = vld [vmem:[%s1 + $0x10] sm:$0xf]
      %v146 = vld [vmem:[%s1 + $0x14] sm:$0xf]
      %v147 = vld [vmem:[%s1 + $0x18] sm:$0xf]
      %v148 = vld [vmem:[%s1 + $0x1c] sm:$0xf]
      %v149 = vld [vmem:[%s1 + $0x20] sm:$0xf]
      %v150 = vld [vmem:[%s1 + $0x24] sm:$0xf]
      %v151 = vld [vmem:[%s1 + $0x28] sm:$0xf]
      %v152 = vld [vmem:[%s1 + $0x2c] sm:$0xf]
      %v153 = vld [vmem:[%s1 + $0x30] sm:$0xf]
      %v154 = vld [vmem:[%s1 + $0x34] sm:$0xf]
      %v155 = vld [vmem:[%s1 + $0x38] sm:$0xf]
      %v156 = vld [vmem:[%s1 + $0x3c] sm:$0xf]
      %v173 = vunpack.c.l.b16 %v141
      %v174 = vunpack.c.l.b16 %v142
      %v175 = vunpack.c.l.b16 %v143
      %v176 = vunpack.c.l.b16 %v144
      %v177 = vunpack.c.l.b16 %v145
      %v178 = vunpack.c.l.b16 %v146
      %v179 = vunpack.c.l.b16 %v147
      %v180 = vunpack.c.l.b16 %v148
      %v181 = vunpack.c.l.b16 %v149
      %v182 = vunpack.c.l.b16 %v150
      %v183 = vunpack.c.l.b16 %v151
      %v184 = vunpack.c.l.b16 %v152
      %v185 = vunpack.c.l.b16 %v153
      %v186 = vunpack.c.l.b16 %v154
      %v187 = vunpack.c.l.b16 %v155
      %v188 = vunpack.c.l.b16 %v156
      %v189 = vpack.c.b16 %v174, %v173
      %v190 = vpack.c.b16 %v176, %v175
      %v191 = vpack.c.b16 %v178, %v177
      %v192 = vpack.c.b16 %v180, %v179
      %v193 = vpack.c.b16 %v182, %v181
      %v194 = vpack.c.b16 %v184, %v183
      %v195 = vpack.c.b16 %v186, %v185
      %v196 = vpack.c.b16 %v188, %v187
      %205 = vmatprep.subr.bf16.mxu0 0
      %206 = vmatpush1.bf16.msra.mxu0 %v189
      %207 = vmatprep.subr.bf16.mxu0 0
      %208 = vmatpush1.bf16.msra.mxu0 %v190
      %209 = vmatprep.subr.bf16.mxu0 0
      %210 = vmatpush1.bf16.msra.mxu0 %v191
      %211 = vmatprep.subr.bf16.mxu0 0
      %212 = vmatpush1.bf16.msra.mxu0 %v192
      %213 = vmatprep.subr.bf16.mxu0 0
      %214 = vmatpush1.bf16.msra.mxu0 %v193
      %215 = vmatprep.subr.bf16.mxu0 0
      %216 = vmatpush1.bf16.msra.mxu0 %v194
      %217 = vmatprep.subr.bf16.mxu0 0
      %218 = vmatpush1.bf16.msra.mxu0 %v195
      %219 = vmatprep.subr.bf16.mxu0 0
      %220 = vmatpush1.bf16.msra.mxu0 %v196
      %221 = vmatprep.subr.bf16.mxu0 0
      %222 = vmatpush1.bf16.msra.mxu0 0
      %223 = vmatprep.subr.bf16.mxu0 0
      %224 = vmatpush1.bf16.msra.mxu0 0
      %225 = vmatprep.subr.bf16.mxu0 0
      %226 = vmatpush1.bf16.msra.mxu0 0
      %227 = vmatprep.subr.bf16.mxu0 0
      %228 = vmatpush1.bf16.msra.mxu0 0
      %229 = vmatprep.subr.bf16.mxu0 0
      %230 = vmatpush1.bf16.msra.mxu0 0
      %231 = vmatprep.subr.bf16.mxu0 0
      %232 = vmatpush1.bf16.msra.mxu0 0
      %233 = vmatprep.subr.bf16.mxu0 0
      %234 = vmatpush1.bf16.msra.mxu0 0
      %235 = vmatprep.subr.bf16.mxu0 0
      %236 = vmatpush1.bf16.msra.mxu0 0
      %237 = vmatprep.mubr.bf16.mxu0 0
      %238 = vmatmul.mubr.bf16.gmra.mrb[0].mxu0 %v140
      %v239 = vpop.f32.mrb[0].mxu0
      %v240 = vadd.f32 0.0, %v239
      %v241 = vpop.f32.mrb[0].mxu0
      %v242 = vpop.f32.mrb[0].mxu0
      %v243 = vpop.f32.mrb[0].mxu0
      %244 = vdwg.mxu0
      %v245 = vpack.c.bf16 %v240, %v240
      %246 = vst [vmem:[%s138] sm:$0xf] %v245
      %p247 = scmp.lt.s32.totalorder %s13, 1
      %s248 = scalar_select %p247, %s13, 1
      %s249 = smul.addr %s248, 4
      %s250 = scalar_lea.vmem %s2, %s249
      // Predicated region
      $region29: #{gcn_forward_pallas.3} parent=27 // pred_check
        %p251 = pneg %p78
      $region30: #{gcn_forward_pallas.3} parent=27 // pred_check_branch
        %253 = sbr.rel (%p251) target = $region32
      $region31: #{gcn_forward_pallas.3} parent=27 // pred_region
        _
      $region32: #{gcn_forward_pallas.3} parent=27 // pred_fallthru
        _
    $region28: #{gcn_forward_pallas.3} parent=5 // pred_fallthru
      _
    %p254 = scmp.le.s32.totalorder 2, %s8
    // Predicated region
    $region33: #{gcn_forward_pallas.3} parent=5 // pred_check
      %p255 = pneg %p254
    $region34: #{gcn_forward_pallas.3} parent=5 // pred_check_branch
      %257 = sbr.rel (%p255) target = $region36
    $region35: #{gcn_forward_pallas.3} parent=5 // pred_region
      %s258 = ssub.s32 %s8, 2
      // Predicated region
      $region37: #{gcn_forward_pallas.3} parent=35 // pred_check
        %p259 = pneg %p84
      $region38: #{gcn_forward_pallas.3} parent=35 // pred_check_branch
        %261 = sbr.rel (%p259) target = $region40
      $region39: #{gcn_forward_pallas.3} parent=35 // pred_region
        %p262 = scmp.lt.s32.totalorder %s14, 1
        %s263 = scalar_select %p262, %s14, 1
        %s264 = smul.addr %s263, 4
        %s265 = scalar_lea.vmem %s2, %s264
      $region40: #{gcn_forward_pallas.3} parent=35 // pred_fallthru
        _
    $region36: #{gcn_forward_pallas.3} parent=5 // pred_fallthru
      _
  $region6: #{gcn_forward_pallas.3} parent=0 // loop_footer
    %s12 = sadd.s32 1, %s8
  $region7: #{gcn_forward_pallas.3} parent=0 // loop_footer_branch
    %7 = sbr.rel target = $region3
  $region8: #{gcn_forward_pallas.3} parent=0 // loop_exit
    _

// kernel: gcn_forward_pallas.4
$region0: #{gcn_forward_pallas.4}
  #allocation0 [shape = 'u32[]', space=smem, size = 0x4, offset = 0x4, fixed_abs, tag = 'smem constant byte address 0x4 - core index']
  #allocation1 [shape = 'u32[144,128]{1,0:T(1,128)}', space=vmem, size = 0x12000, scoped, tag = 'internal scratch']
  %s0 = inlined_call_operand.vmem [shape: bf16[16,16], index: 0, kind: input, shape index: {}]
  %s1 = inlined_call_operand.vmem [shape: bf16[16,128], index: 1, kind: input, shape index: {}]
  %s2 = inlined_call_operand.vmem [shape: f32[1,128], index: 2, kind: input, shape index: {}]
  %s3 = inlined_call_operand.vmem [shape: bf16[128,128], index: 3, kind: input, shape index: {}]
  %s4 = inlined_call_operand.vmem [shape: bf16[16,128], index: 4, kind: output, shape index: {}]
  %s5 = sld [smem:[#allocation0]]
  $region49: #{gcn_forward_pallas.4} parent=0
    _
  %s7 = ssub.s32 1, %s5
  %s8 = scalar_select 0, %s7, %s5
  loop: start=0, step=1, limit=4
  $region2: #{gcn_forward_pallas.4} parent=0 // loop_pre_header
    _
  $region3: #{gcn_forward_pallas.4} parent=0 // loop_header
    %s10 = sphi 0, %s14
    %p11 = scmp.ge.s32.totalorder %s10, 4
    %s20 = sphi 0, %s22
    %s23 = sphi 0, %s20
    %s24 = sphi 0, %s23
    %s40 = sphi 0, %s24
    %s44 = sphi 0, %s44
    %s46 = sphi 0, %s44
    %s47 = sphi 0, %s46
    %s61 = sphi 0, %s47
    %s65 = sphi 0, %s65
    %s67 = sphi 0, %s65
    %s68 = sphi 0, %s67
    %s82 = sphi 0, %s68
    %s86 = sphi 0, %s86
    %s88 = sphi 0, %s86
    %s89 = sphi 0, %s88
    %s103 = sphi 0, %s89
    %s109 = sphi 0, %s111
    %s112 = sphi 0, %s109
    %s113 = sphi 0, %s112
    %s129 = sphi 0, %s113
  $region4: #{gcn_forward_pallas.4} parent=0 // loop_header_branch
    %13 = sbr.rel (%p11) target = $region8
  $region5: #{gcn_forward_pallas.4} parent=0 // loop_body
    %s15 = ssub.s32 %s10, 1
    %s16 = ssub.s32 %s10, 2
    %s17 = sadd.s32 %s10, 1
    %s18 = ssub.s32 %s10, %s17
    %p19 = scmp.eq.s32.totalorder %s18, 0
    %s21 = sadd.s32 %s20, 1
    %s22 = scalar_select %p19, %s20, %s21
    %p25 = pneg %p19
    %p26 = scmp.eq.s32.totalorder %s10, 1
    %p27 = por %p25, %p26
    %p28 = scmp.ne.s32.totalorder %s20, %s23
    %p29 = scmp.eq.s32.totalorder %s10, 0
    %p30 = por %p28, %p29
    %p31 = scmp.ne.s32.totalorder %s20, %s23
    %p32 = scmp.eq.s32.totalorder %s15, 1
    %p33 = por %p31, %p32
    %p34 = scmp.ne.s32.totalorder %s23, %s24
    %p35 = scmp.eq.s32.totalorder %s15, 0
    %p36 = por %p34, %p35
    %p37 = scmp.ne.s32.totalorder %s23, %s24
    %p38 = scmp.eq.s32.totalorder %s16, 1
    %p39 = por %p37, %p38
    %p41 = scmp.ne.s32.totalorder %s24, %s40
    %p42 = scmp.eq.s32.totalorder %s16, 0
    %p43 = por %p41, %p42
    %s45 = sadd.s32 %s44, 1
    %p48 = scmp.eq.s32.totalorder %s10, 1
    %p49 = scmp.ne.s32.totalorder %s44, %s46
    %p50 = scmp.eq.s32.totalorder %s10, 0
    %p51 = por %p49, %p50
    %p52 = scmp.ne.s32.totalorder %s44, %s46
    %p53 = scmp.eq.s32.totalorder %s15, 1
    %p54 = por %p52, %p53
    %p55 = scmp.ne.s32.totalorder %s46, %s47
    %p56 = scmp.eq.s32.totalorder %s15, 0
    %p57 = por %p55, %p56
    %p58 = scmp.ne.s32.totalorder %s46, %s47
    %p59 = scmp.eq.s32.totalorder %s16, 1
    %p60 = por %p58, %p59
    %p62 = scmp.ne.s32.totalorder %s47, %s61
    %p63 = scmp.eq.s32.totalorder %s16, 0
    %p64 = por %p62, %p63
    %s66 = sadd.s32 %s65, 1
    %p69 = scmp.eq.s32.totalorder %s10, 1
    %p70 = scmp.ne.s32.totalorder %s65, %s67
    %p71 = scmp.eq.s32.totalorder %s10, 0
    %p72 = por %p70, %p71
    %p73 = scmp.ne.s32.totalorder %s65, %s67
    %p74 = scmp.eq.s32.totalorder %s15, 1
    %p75 = por %p73, %p74
    %p76 = scmp.ne.s32.totalorder %s67, %s68
    %p77 = scmp.eq.s32.totalorder %s15, 0
    %p78 = por %p76, %p77
    %p79 = scmp.ne.s32.totalorder %s67, %s68
    %p80 = scmp.eq.s32.totalorder %s16, 1
    %p81 = por %p79, %p80
    %p83 = scmp.ne.s32.totalorder %s68, %s82
    %p84 = scmp.eq.s32.totalorder %s16, 0
    %p85 = por %p83, %p84
    %s87 = sadd.s32 %s86, 1
    %p90 = scmp.eq.s32.totalorder %s10, 1
    %p91 = scmp.ne.s32.totalorder %s86, %s88
    %p92 = scmp.eq.s32.totalorder %s10, 0
    %p93 = por %p91, %p92
    %p94 = scmp.ne.s32.totalorder %s86, %s88
    %p95 = scmp.eq.s32.totalorder %s15, 1
    %p96 = por %p94, %p95
    %p97 = scmp.ne.s32.totalorder %s88, %s89
    %p98 = scmp.eq.s32.totalorder %s15, 0
    %p99 = por %p97, %p98
    %p100 = scmp.ne.s32.totalorder %s88, %s89
    %p101 = scmp.eq.s32.totalorder %s16, 1
    %p102 = por %p100, %p101
    %p104 = scmp.ne.s32.totalorder %s89, %s103
    %p105 = scmp.eq.s32.totalorder %s16, 0
    %p106 = por %p104, %p105
    %s107 = ssub.s32 %s10, %s17
    %p108 = scmp.eq.s32.totalorder %s107, 0
    %s110 = sadd.s32 %s109, 1
    %s111 = scalar_select %p108, %s109, %s110
    %p114 = pneg %p108
    %p115 = scmp.eq.s32.totalorder %s10, 1
    %p116 = por %p114, %p115
    %p117 = scmp.ne.s32.totalorder %s109, %s112
    %p118 = scmp.eq.s32.totalorder %s10, 0
    %p119 = por %p117, %p118
    %p120 = scmp.ne.s32.totalorder %s109, %s112
    %p121 = scmp.eq.s32.totalorder %s15, 1
    %p122 = por %p120, %p121
    %p123 = scmp.ne.s32.totalorder %s112, %s113
    %p124 = scmp.eq.s32.totalorder %s15, 0
    %p125 = por %p123, %p124
    %p126 = scmp.ne.s32.totalorder %s112, %s113
    %p127 = scmp.eq.s32.totalorder %s16, 1
    %p128 = por %p126, %p127
    %p130 = scmp.ne.s32.totalorder %s113, %s129
    %p131 = scmp.eq.s32.totalorder %s16, 0
    %p132 = por %p130, %p131
    %p133 = scmp.le.s32.totalorder 1, %s10
    %p134 = scmp.lt.s32.totalorder %s10, 3
    %p135 = pnand %p133, %p134
    %p136 = pneg %p135
    // Predicated region
    $region9: #{gcn_forward_pallas.4} parent=5 // pred_check
      _
    $region10: #{gcn_forward_pallas.4} parent=5 // pred_check_branch
      %138 = sbr.rel (%p135) target = $region12
    $region11: #{gcn_forward_pallas.4} parent=5 // pred_region
      %s139 = ssub.s32 %s10, 1
      // Predicated region
      $region13: #{gcn_forward_pallas.4} parent=11 // pred_check
        %p140 = pneg %p57
      $region14: #{gcn_forward_pallas.4} parent=11 // pred_check_branch
        %142 = sbr.rel (%p140) target = $region16
      $region15: #{gcn_forward_pallas.4} parent=11 // pred_region
        _
      $region16: #{gcn_forward_pallas.4} parent=11 // pred_fallthru
        _
      // Predicated region
      $region17: #{gcn_forward_pallas.4} parent=11 // pred_check
        %p143 = pneg %p78
      $region18: #{gcn_forward_pallas.4} parent=11 // pred_check_branch
        %145 = sbr.rel (%p143) target = $region20
      $region19: #{gcn_forward_pallas.4} parent=11 // pred_region
        _
      $region20: #{gcn_forward_pallas.4} parent=11 // pred_fallthru
        _
      // Predicated region
      $region21: #{gcn_forward_pallas.4} parent=11 // pred_check
        %p146 = pneg %p99
      $region22: #{gcn_forward_pallas.4} parent=11 // pred_check_branch
        %148 = sbr.rel (%p146) target = $region24
      $region23: #{gcn_forward_pallas.4} parent=11 // pred_region
        _
      $region24: #{gcn_forward_pallas.4} parent=11 // pred_fallthru
        _
    $region12: #{gcn_forward_pallas.4} parent=5 // pred_fallthru
      _
    %p149 = scmp.lt.s32.totalorder %s10, 2
    // Predicated region
    $region25: #{gcn_forward_pallas.4} parent=5 // pred_check
      %p150 = pneg %p149
    $region26: #{gcn_forward_pallas.4} parent=5 // pred_check_branch
      %152 = sbr.rel (%p150) target = $region28
    $region27: #{gcn_forward_pallas.4} parent=5 // pred_region
      // Predicated region
      $region29: #{gcn_forward_pallas.4} parent=27 // pred_check
        %p153 = pneg %p30
      $region30: #{gcn_forward_pallas.4} parent=27 // pred_check_branch
        %155 = sbr.rel (%p153) target = $region32
      $region31: #{gcn_forward_pallas.4} parent=27 // pred_region
        %p156 = scmp.lt.s32.totalorder %s10, 1
        %s157 = scalar_select %p156, %s10, 1
        %s158 = smul.addr %s157, 4
        %s159 = scalar_lea.vmem %s0, %s158
      $region32: #{gcn_forward_pallas.4} parent=27 // pred_fallthru
        _
    $region28: #{gcn_forward_pallas.4} parent=5 // pred_fallthru
      _
    %p160 = scmp.le.s32.totalorder 1, %s10
    %p161 = scmp.lt.s32.totalorder %s10, 3
    %p162 = pnand %p160, %p161
    %p163 = pneg %p162
    // Predicated region
    $region33: #{gcn_forward_pallas.4} parent=5 // pred_check
      _
    $region34: #{gcn_forward_pallas.4} parent=5 // pred_check_branch
      %165 = sbr.rel (%p162) target = $region36
    $region35: #{gcn_forward_pallas.4} parent=5 // pred_region
      %s166 = ssub.s32 %s10, 1
      %p167 = scmp.lt.s32.totalorder %s15, 1
      %s168 = scalar_select %p167, %s15, 1
      %s169 = smul.addr %s168, 4
      %s170 = scalar_lea.vmem %s0, %s169
      %p171 = pneg %p36
      %p172 = pneg %p33
      %p173 = pneg %p57
      %p174 = pneg %p54
      %p175 = pneg %p78
      %p176 = pneg %p75
      %p177 = pneg %p99
      %p178 = pneg %p96
      %p179 = pneg %p125
      %p180 = pneg %p122
      %p181 = scmp.lt.s32.totalorder %s15, 1
      %s182 = scalar_select %p181, %s15, 1
      %s183 = smul.addr %s182, 4
      %s184 = scalar_lea.vmem %s4, %s183
      %p185 = scmp.lt.s32.totalorder %s15, 1
      %s186 = scalar_select %p185, %s15, 1
      %s187 = smul.addr %s186, 4
      %s188 = scalar_lea.vmem %s0, %s187
      %p189 = scmp.lt.s32.totalorder %s15, 1
      %s190 = scalar_select %p189, %s15, 1
      %s191 = smul.addr %s190, 4
      %s192 = scalar_lea.vmem %s4, %s191
      %v194 = vld [vmem:[%s188] sm:$0xf]
      %v195 = vld [vmem:[%s1] sm:$0xf]
      %v196 = vld [vmem:[%s1 + $0x4] sm:$0xf]
      %v197 = vld [vmem:[%s2] sm:$0x1]
      %v199 = vlaneseq
      %v200 = vshrl.u32 %v199, 7
      %v201 = vsub.s32 0, %v200
      %v202 = vrot.slane %v197, %v201
      %v206 = vunpack.c.l.b16 %v195
      %v207 = vunpack.c.l.b16 %v196
      %v208 = vpack.c.b16 %v207, %v206
      %vm210 = vcmask 130048
      %v212 = vsel %vm210, %v194, 0
      %214 = vmatprep.subr.bf16.mxu0 0
      %215 = vmatpush1.bf16.msra.mxu0 %v208
      %216 = vmatprep.subr.bf16.mxu0 0
      %217 = vmatpush1.bf16.msra.mxu0 0
      %218 = vmatprep.subr.bf16.mxu0 0
      %219 = vmatpush1.bf16.msra.mxu0 0
      %220 = vmatprep.subr.bf16.mxu0 0
      %221 = vmatpush1.bf16.msra.mxu0 0
      %222 = vmatprep.subr.bf16.mxu0 0
      %223 = vmatpush1.bf16.msra.mxu0 0
      %224 = vmatprep.subr.bf16.mxu0 0
      %225 = vmatpush1.bf16.msra.mxu0 0
      %226 = vmatprep.subr.bf16.mxu0 0
      %227 = vmatpush1.bf16.msra.mxu0 0
      %228 = vmatprep.subr.bf16.mxu0 0
      %229 = vmatpush1.bf16.msra.mxu0 0
      %230 = vmatprep.subr.bf16.mxu0 0
      %231 = vmatpush1.bf16.msra.mxu0 0
      %232 = vmatprep.subr.bf16.mxu0 0
      %233 = vmatpush1.bf16.msra.mxu0 0
      %234 = vmatprep.subr.bf16.mxu0 0
      %235 = vmatpush1.bf16.msra.mxu0 0
      %236 = vmatprep.subr.bf16.mxu0 0
      %237 = vmatpush1.bf16.msra.mxu0 0
      %238 = vmatprep.subr.bf16.mxu0 0
      %239 = vmatpush1.bf16.msra.mxu0 0
      %240 = vmatprep.subr.bf16.mxu0 0
      %241 = vmatpush1.bf16.msra.mxu0 0
      %242 = vmatprep.subr.bf16.mxu0 0
      %243 = vmatpush1.bf16.msra.mxu0 0
      %244 = vmatprep.subr.bf16.mxu0 0
      %245 = vmatpush1.bf16.msra.mxu0 0
      %246 = vmatprep.mubr.bf16.mxu0 0
      %247 = vmatmul.mubr.bf16.gmra.mrb[0].mxu0 %v212
      %v248 = vpop.f32.mrb[0].mxu0
      %v249 = vadd.f32 %v202, %v248
      %v250 = vpop.f32.mrb[0].mxu0
      %v251 = vpop.f32.mrb[0].mxu0
      %v252 = vpop.f32.mrb[0].mxu0
      %253 = vdwg.mxu0
      %v254 = vmax.f32 %v249, 0.0
      %v255 = vpack.c.bf16 %v254, %v254
      %v256 = vld [vmem:[%s3] sm:$0xf]
      %v257 = vld [vmem:[%s3 + $0x4] sm:$0xf]
      %v258 = vld [vmem:[%s3 + $0x8] sm:$0xf]
      %v259 = vld [vmem:[%s3 + $0xc] sm:$0xf]
      %v260 = vld [vmem:[%s3 + $0x10] sm:$0xf]
      %v261 = vld [vmem:[%s3 + $0x14] sm:$0xf]
      %v262 = vld [vmem:[%s3 + $0x18] sm:$0xf]
      %v263 = vld [vmem:[%s3 + $0x1c] sm:$0xf]
      %v264 = vld [vmem:[%s3 + $0x20] sm:$0xf]
      %v265 = vld [vmem:[%s3 + $0x24] sm:$0xf]
      %v266 = vld [vmem:[%s3 + $0x28] sm:$0xf]
      %v267 = vld [vmem:[%s3 + $0x2c] sm:$0xf]
      %v268 = vld [vmem:[%s3 + $0x30] sm:$0xf]
      %v269 = vld [vmem:[%s3 + $0x34] sm:$0xf]
      %v270 = vld [vmem:[%s3 + $0x38] sm:$0xf]
      %v271 = vld [vmem:[%s3 + $0x3c] sm:$0xf]
      %v288 = vunpack.c.l.b16 %v256
      %v289 = vunpack.c.l.b16 %v257
      %v290 = vunpack.c.l.b16 %v258
      %v291 = vunpack.c.l.b16 %v259
      %v292 = vunpack.c.l.b16 %v260
      %v293 = vunpack.c.l.b16 %v261
      %v294 = vunpack.c.l.b16 %v262
      %v295 = vunpack.c.l.b16 %v263
      %v296 = vunpack.c.l.b16 %v264
      %v297 = vunpack.c.l.b16 %v265
      %v298 = vunpack.c.l.b16 %v266
      %v299 = vunpack.c.l.b16 %v267
      %v300 = vunpack.c.l.b16 %v268
      %v301 = vunpack.c.l.b16 %v269
      %v302 = vunpack.c.l.b16 %v270
      %v303 = vunpack.c.l.b16 %v271
      %v304 = vpack.c.b16 %v289, %v288
      %v305 = vpack.c.b16 %v291, %v290
      %v306 = vpack.c.b16 %v293, %v292
      %v307 = vpack.c.b16 %v295, %v294
      %v308 = vpack.c.b16 %v297, %v296
      %v309 = vpack.c.b16 %v299, %v298
      %v310 = vpack.c.b16 %v301, %v300
      %v311 = vpack.c.b16 %v303, %v302
      %320 = vmatprep.subr.bf16.mxu0 0
      %321 = vmatpush1.bf16.msra.mxu0 %v304
      %322 = vmatprep.subr.bf16.mxu0 0
      %323 = vmatpush1.bf16.msra.mxu0 %v305
      %324 = vmatprep.subr.bf16.mxu0 0
      %325 = vmatpush1.bf16.msra.mxu0 %v306
      %326 = vmatprep.subr.bf16.mxu0 0
      %327 = vmatpush1.bf16.msra.mxu0 %v307
      %328 = vmatprep.subr.bf16.mxu0 0
      %329 = vmatpush1.bf16.msra.mxu0 %v308
      %330 = vmatprep.subr.bf16.mxu0 0
      %331 = vmatpush1.bf16.msra.mxu0 %v309
      %332 = vmatprep.subr.bf16.mxu0 0
      %333 = vmatpush1.bf16.msra.mxu0 %v310
      %334 = vmatprep.subr.bf16.mxu0 0
      %335 = vmatpush1.bf16.msra.mxu0 %v311
      %336 = vmatprep.subr.bf16.mxu0 0
      %337 = vmatpush1.bf16.msra.mxu0 0
      %338 = vmatprep.subr.bf16.mxu0 0
      %339 = vmatpush1.bf16.msra.mxu0 0
      %340 = vmatprep.subr.bf16.mxu0 0
      %341 = vmatpush1.bf16.msra.mxu0 0
      %342 = vmatprep.subr.bf16.mxu0 0
      %343 = vmatpush1.bf16.msra.mxu0 0
      %344 = vmatprep.subr.bf16.mxu0 0
      %345 = vmatpush1.bf16.msra.mxu0 0
      %346 = vmatprep.subr.bf16.mxu0 0
      %347 = vmatpush1.bf16.msra.mxu0 0
      %348 = vmatprep.subr.bf16.mxu0 0
      %349 = vmatpush1.bf16.msra.mxu0 0
      %350 = vmatprep.subr.bf16.mxu0 0
      %351 = vmatpush1.bf16.msra.mxu0 0
      %352 = vmatprep.mubr.bf16.mxu0 0
      %353 = vmatmul.mubr.bf16.gmra.mrb[0].mxu0 %v255
      %v354 = vpop.f32.mrb[0].mxu0
      %v355 = vadd.f32 0.0, %v354
      %v356 = vpop.f32.mrb[0].mxu0
      %v357 = vpop.f32.mrb[0].mxu0
      %v358 = vpop.f32.mrb[0].mxu0
      %359 = vdwg.mxu0
      %v360 = vpack.c.bf16 %v355, %v355
      %361 = vst [vmem:[%s192] sm:$0xf] %v360
      %p362 = scmp.lt.s32.totalorder %s15, 1
      %s363 = scalar_select %p362, %s15, 1
      %s364 = smul.addr %s363, 4
      %s365 = scalar_lea.vmem %s4, %s364
      // Predicated region
      $region37: #{gcn_forward_pallas.4} parent=35 // pred_check
        %p366 = pneg %p122
      $region38: #{gcn_forward_pallas.4} parent=35 // pred_check_branch
        %368 = sbr.rel (%p366) target = $region40
      $region39: #{gcn_forward_pallas.4} parent=35 // pred_region
        _
      $region40: #{gcn_forward_pallas.4} parent=35 // pred_fallthru
        _
    $region36: #{gcn_forward_pallas.4} parent=5 // pred_fallthru
      _
    %p369 = scmp.le.s32.totalorder 2, %s10
    // Predicated region
    $region41: #{gcn_forward_pallas.4} parent=5 // pred_check
      %p370 = pneg %p369
    $region42: #{gcn_forward_pallas.4} parent=5 // pred_check_branch
      %372 = sbr.rel (%p370) target = $region44
    $region43: #{gcn_forward_pallas.4} parent=5 // pred_region
      %s373 = ssub.s32 %s10, 2
      // Predicated region
      $region45: #{gcn_forward_pallas.4} parent=43 // pred_check
        %p374 = pneg %p128
      $region46: #{gcn_forward_pallas.4} parent=43 // pred_check_branch
        %376 = sbr.rel (%p374) target = $region48
      $region47: #{gcn_forward_pallas.4} parent=43 // pred_region
        %p377 = scmp.lt.s32.totalorder %s16, 1
        %s378 = scalar_select %p377, %s16, 1
        %s379 = smul.addr %s378, 4
        %s380 = scalar_lea.vmem %s4, %s379
      $region48: #{gcn_forward_pallas.4} parent=43 // pred_fallthru
        _
    $region44: #{gcn_forward_pallas.4} parent=5 // pred_fallthru
      _
  $region6: #{gcn_forward_pallas.4} parent=0 // loop_footer
    %s14 = sadd.s32 1, %s10
  $region7: #{gcn_forward_pallas.4} parent=0 // loop_footer_branch
    %9 = sbr.rel target = $region3
  $region8: #{gcn_forward_pallas.4} parent=0 // loop_exit
    _

</llo_original>
